<compile_context>
chip_gen: v7x
topology: tpu7x:2x2x1
jax: 0.10.0
libtpu: 0.0.40
codegen_flags: <defaults>
</compile_context>

<pallas_src>
import functools
import math

import jax
import jax.numpy as jnp
from jax.experimental import pallas as pl
from jax.experimental.pallas import tpu as pltpu

_LANE = 128
_CSTAT = 128            # compact-stat lane width (padded so every matmul dim >= 128)
_MAX_FOLD_WIDTH = 2048  # don't fold if lcm(features, 128) gets silly-wide
_MAX_TILE_ROWS = 8192


def _vmem_policy():
    """Return (tile_budget_bytes, vmem_limit_bytes) sized to this chip's VMEM."""
    cap = 64 << 20  # conservative default: v7x-class 64 MiB per TensorCore
    try:
        cap = getattr(pltpu.get_tpu_info(), "vmem_capacity_bytes", cap)
    except Exception:
        pass
    if cap < (96 << 20):            # v7x: 64 MiB per TC
        return 12 << 20, 40 << 20
    return 24 << 20, 64 << 20       # v5e / v6e: 128 MiB


def _pick_row_tile(n_rows, width, itemsize, tile_budget):
    """Largest row tile fitting the budget, forcing >=~4 grid steps on big inputs."""
    # 2x double-buffered input + output tiles, plus ~4 f32 intermediates
    # (x_f32 / diff / broadcasts / y) that materialize in VMEM per tile row.
    per_row = 4 * width * itemsize + 4 * width * 4
    cand = max(tile_budget // per_row, 1)
    cand = min(cand, _MAX_TILE_ROWS)
    total_bytes = n_rows * width * itemsize
    if total_bytes > (2 << 20):
        # Never collapse to a single (or two) huge blocks: keep the software
        # pipeline's prefetch / compute / writeback overlapping.
        cand = min(cand, -(-n_rows // 4))
    if cand >= n_rows:
        return n_rows               # single full-extent block (tiny inputs only)
    sub = 16 if itemsize == 2 else 8
    rt = max((cand // sub) * sub, sub)
    return min(rt, n_rows)


def _plain_kernel(x_ref, gamma_ref, beta_ref, o_ref, *, eps, nfeat):
    # x_ref: (TR, F); normalize over the lane (feature) axis, math in f32.
    x = x_ref[...].astype(jnp.float32)
    mean = jnp.mean(x, axis=-1, keepdims=True)
    diff = x - mean
    # Unbiased variance (ddof=1), matching torch.Tensor.std default.
    var = jnp.sum(diff * diff, axis=-1, keepdims=True) / jnp.float32(nfeat - 1)
    d = jnp.sqrt(var) + eps                     # eps added to the *std* (module spec)
    inv = 1.0 / d                               # exact; only a (TR, 1) column
    y = gamma_ref[...] * (diff * inv) + beta_ref[...]
    o_ref[...] = y.astype(o_ref.dtype)


def _folded_kernel(x_ref, gamma_ref, beta_ref, s_ref, st_ref, o_ref, *, eps, nfeat):
    # x_ref: (TR, width) with fold = width // nfeat logical rows packed along lanes.
    # s_ref: (width, _CSTAT) 0/1 lane->segment indicator (columns >= fold are zero);
    # st_ref = s_ref.T.  Segment sums / broadcasts are thin MXU matmuls with >=128
    # lane shapes; the sqrt / reciprocal chain runs on the compact (TR, _CSTAT)
    # stats, so EUP work is ~width/128 of a full-width chain.
    x = x_ref[...].astype(jnp.float32)
    s = s_ref[...]
    st = st_ref[...]
    seg_sum = jnp.dot(x, s, preferred_element_type=jnp.float32)         # (TR, _CSTAT)
    mean_c = seg_sum / jnp.float32(nfeat)
    mean_b = jnp.dot(mean_c, st, preferred_element_type=jnp.float32)    # (TR, width)
    diff = x - mean_b
    var_c = jnp.dot(diff * diff, s, preferred_element_type=jnp.float32) \
        / jnp.float32(nfeat - 1)
    d = jnp.sqrt(var_c) + eps
    inv_c = jnp.where(d != 0.0, 1.0 / d, 0.0)   # guard all-zero padded stat columns
    inv_b = jnp.dot(inv_c, st, preferred_element_type=jnp.float32)      # (TR, width)
    y = gamma_ref[...] * (diff * inv_b) + beta_ref[...]
    o_ref[...] = y.astype(o_ref.dtype)


def _run_plain(x2, gamma32, beta32, eps, features, row_tile, tile_budget, cparams):
    rows = x2.shape[0]
    itemsize = jnp.dtype(x2.dtype).itemsize
    rt = row_tile if row_tile is not None else _pick_row_tile(
        rows, features, itemsize, tile_budget)
    return pl.pallas_call(
        functools.partial(_plain_kernel, eps=eps, nfeat=features),
        out_shape=jax.ShapeDtypeStruct((rows, features), x2.dtype),
        grid_spec=pltpu.PrefetchScalarGridSpec(
            num_scalar_prefetch=0,
            grid=(pl.cdiv(rows, rt),),
            in_specs=[
                pl.BlockSpec((rt, features), lambda i: (i, 0)),
                pl.BlockSpec((1, features), lambda i: (0, 0)),   # gamma (resident)
                pl.BlockSpec((1, features), lambda i: (0, 0)),   # beta  (resident)
            ],
            out_specs=pl.BlockSpec((rt, features), lambda i: (i, 0)),
        ),
        compiler_params=cparams,
    )(x2, gamma32, beta32)


def _run_folded(x2, gamma32, beta32, eps, features, fold, row_tile, tile_budget, cparams):
    rows = x2.shape[0]
    width = fold * features
    n_rows = rows // fold
    itemsize = jnp.dtype(x2.dtype).itemsize
    xw = x2.reshape(n_rows, width)                       # free metadata reshape
    gam = jnp.tile(gamma32, (1, fold))
    bet = jnp.tile(beta32, (1, fold))
    seg = jnp.arange(width, dtype=jnp.int32) // features  # lane -> segment id
    col = jnp.arange(_CSTAT, dtype=jnp.int32)
    s = (seg[:, None] == col[None, :]).astype(jnp.float32)   # (width, _CSTAT)
    st = jnp.transpose(s)                                     # (_CSTAT, width)
    rt = row_tile if row_tile is not None else _pick_row_tile(
        n_rows, width, itemsize, tile_budget)
    out = pl.pallas_call(
        functools.partial(_folded_kernel, eps=eps, nfeat=features),
        out_shape=jax.ShapeDtypeStruct((n_rows, width), x2.dtype),
        grid_spec=pltpu.PrefetchScalarGridSpec(
            num_scalar_prefetch=0,
            grid=(pl.cdiv(n_rows, rt),),
            in_specs=[
                pl.BlockSpec((rt, width), lambda i: (i, 0)),
                pl.BlockSpec((1, width), lambda i: (0, 0)),        # gamma (resident)
                pl.BlockSpec((1, width), lambda i: (0, 0)),        # beta  (resident)
                pl.BlockSpec((width, _CSTAT), lambda i: (0, 0)),   # indicator S
                pl.BlockSpec((_CSTAT, width), lambda i: (0, 0)),   # S^T
            ],
            out_specs=pl.BlockSpec((rt, width), lambda i: (i, 0)),
        ),
        compiler_params=cparams,
    )(xw, gam, bet, s, st)
    return out.reshape(rows, features)


def layer_norm(x, gamma, beta, eps=1e-6, row_tile=None):
    """x: (..., features). gamma/beta: (features,). Returns same shape/dtype as x."""
    orig_shape = x.shape
    features = orig_shape[-1]
    rows = math.prod(orig_shape[:-1]) if len(orig_shape) > 1 else 1

    gamma32 = gamma.astype(jnp.float32).reshape(1, features)
    beta32 = beta.astype(jnp.float32).reshape(1, features)
    x2 = x.reshape(rows, features)

    tile_budget, vmem_limit = _vmem_policy()
    cparams = pltpu.CompilerParams(
        dimension_semantics=("parallel",),
        vmem_limit_bytes=vmem_limit,
    )

    # Lane folding: whenever features is not already a multiple of 128, pack
    # fold = 128 / gcd(features, 128) logical rows onto the lane axis so every
    # load / store (incl. the output) is a full, unmasked 128-lane access.
    base = _LANE // math.gcd(features, _LANE)
    fold = base if (base > 1 and base * features <= _MAX_FOLD_WIDTH) else 1

    if fold > 1 and rows >= fold:
        main = (rows // fold) * fold
        x_main = x2 if main == rows else x2[:main]
        out_main = _run_folded(x_main, gamma32, beta32, eps, features, fold,
                               row_tile, tile_budget, cparams)
        if main == rows:
            return out_main.reshape(orig_shape)
        # Ragged tail (< fold rows): keep the fold for the bulk, run the tiny
        # remainder through the plain path (one concat copy; cheaper than masked
        # narrow stores over the whole tensor).
        out_tail = _run_plain(x2[main:], gamma32, beta32, eps, features,
                              None, tile_budget, cparams)
        out = jnp.concatenate([out_main, out_tail], axis=0)
        return out.reshape(orig_shape)

    return _run_plain(x2, gamma32, beta32, eps, features,
                      row_tile, tile_budget, cparams).reshape(orig_shape)


if __name__ == "__main__":
    def ref_ln(x, g, b, eps):
        xf = x.astype(jnp.float32)
        m = jnp.mean(xf, axis=-1, keepdims=True)
        s = jnp.std(xf, axis=-1, keepdims=True, ddof=1)   # unbiased, eps on std
        return (g * (xf - m) / (s + eps) + b).astype(x.dtype)

    # 1) Shape implied by the transformer module: (batch=2, seq=8, hidden=32), f32.
    key = jax.random.PRNGKey(0)
    x = jax.random.normal(key, (2, 8, 32), dtype=jnp.float32)
    g = jnp.ones((32,), jnp.float32)     # matches nn.Parameter(torch.ones)
    b = jnp.zeros((32,), jnp.float32)    # matches nn.Parameter(torch.zeros)
    y = jax.block_until_ready(layer_norm(x, g, b, eps=1e-6))
    assert jnp.allclose(y, ref_ln(x, g, b, 1e-6), atol=1e-4, rtol=1e-4), "folded path"

    # 2) Wide features + ragged row count (partial row block in the plain path).
    k1, k2, k3 = jax.random.split(jax.random.PRNGKey(1), 3)
    x2 = jax.random.normal(k1, (3, 7, 128), dtype=jnp.float32)
    g2 = jax.random.normal(k2, (128,), dtype=jnp.float32)
    b2 = jax.random.normal(k3, (128,), dtype=jnp.float32)
    y2 = jax.block_until_ready(layer_norm(x2, g2, b2, eps=1e-6, row_tile=8))
    assert jnp.allclose(y2, ref_ln(x2, g2, b2, 1e-6), atol=1e-4, rtol=1e-4), "plain path"

    # 3) Non-multiple-of-128 features with rows % fold != 0 (folded bulk + plain tail).
    x3 = jax.random.normal(jax.random.PRNGKey(2), (3, 7, 96), dtype=jnp.float32)
    g3 = jnp.full((96,), 0.5, jnp.float32)
    b3 = jnp.full((96,), 0.25, jnp.float32)
    y3 = jax.block_until_ready(layer_norm(x3, g3, b3, eps=1e-6))
    assert jnp.allclose(y3, ref_ln(x3, g3, b3, 1e-6), atol=1e-4, rtol=1e-4), "ragged fold"

    # 4) bf16 inputs through the folded path.
    x4 = jax.random.normal(jax.random.PRNGKey(3), (4, 16, 64), dtype=jnp.bfloat16)
    g4 = jnp.ones((64,), jnp.float32)
    b4 = jnp.zeros((64,), jnp.float32)
    y4 = jax.block_until_ready(layer_norm(x4, g4, b4, eps=1e-6))
    assert jnp.allclose(y4.astype(jnp.float32),
                        ref_ln(x4, g4, b4, 1e-6).astype(jnp.float32),
                        atol=3e-2, rtol=3e-2), "bf16 folded path"

    print("KERNEL_OK")
</pallas_src>

<mosaic_0001>
module attributes {stable_mosaic.version = 11 : i64} {
  func.func @_folded_kernel(%arg0: i32, %arg1: memref<4x128xf32, #tpu.memory_space<vmem>>, %arg2: memref<1x128xf32, #tpu.memory_space<vmem>>, %arg3: memref<1x128xf32, #tpu.memory_space<vmem>>, %arg4: memref<128x128xf32, #tpu.memory_space<vmem>>, %arg5: memref<128x128xf32, #tpu.memory_space<vmem>>, %arg6: memref<4x128xf32, #tpu.memory_space<vmem>>) attributes {dimension_semantics = [#tpu.dimension_semantics<parallel>], iteration_bounds = array<i64: 1>, scalar_prefetch = 0 : i64, scratch_operands = 0 : i64, tpu.core_type = #tpu.core_type<tc>, window_params = [{transform_indices = @transform_0, window_bounds = array<i64: 4, 128>}, {pipeline_mode = #tpu.pipeline_mode<synchronous>, transform_indices = @transform_1, window_bounds = array<i64: 1, 128>}, {pipeline_mode = #tpu.pipeline_mode<synchronous>, transform_indices = @transform_2, window_bounds = array<i64: 1, 128>}, {pipeline_mode = #tpu.pipeline_mode<synchronous>, transform_indices = @transform_3, window_bounds = array<i64: 128, 128>}, {pipeline_mode = #tpu.pipeline_mode<synchronous>, transform_indices = @transform_4, window_bounds = array<i64: 128, 128>}, {transform_indices = @transform_5, window_bounds = array<i64: 4, 128>}]} {
    %c0 = arith.constant 0 : index
    %c0_0 = arith.constant 0 : index
    %0 = vector.load %arg1[%c0, %c0_0] : memref<4x128xf32, #tpu.memory_space<vmem>>, vector<4x128xf32>
    %c0_1 = arith.constant 0 : index
    %c0_2 = arith.constant 0 : index
    %1 = vector.load %arg4[%c0_1, %c0_2] : memref<128x128xf32, #tpu.memory_space<vmem>>, vector<128x128xf32>
    %c0_3 = arith.constant 0 : index
    %c0_4 = arith.constant 0 : index
    %2 = vector.load %arg5[%c0_3, %c0_4] : memref<128x128xf32, #tpu.memory_space<vmem>>, vector<128x128xf32>
    %cst = arith.constant dense<0.000000e+00> : vector<4x128xf32>
    %3 = tpu.matmul %0, %1, %cst {dimension_numbers = #tpu.dot_dimension_numbers<[1], [0], [0], [1], [0, 0, 1, 1], [], []>} : vector<4x128xf32>, vector<128x128xf32>, vector<4x128xf32> -> vector<4x128xf32>
    %cst_5 = arith.constant 3.200000e+01 : f32
    %4 = vector.broadcast %cst_5 : f32 to vector<4x128xf32>
    %5 = arith.divf %3, %4 : vector<4x128xf32>
    %cst_6 = arith.constant dense<0.000000e+00> : vector<4x128xf32>
    %6 = tpu.matmul %5, %2, %cst_6 {dimension_numbers = #tpu.dot_dimension_numbers<[1], [0], [0], [1], [0, 0, 1, 1], [], []>} : vector<4x128xf32>, vector<128x128xf32>, vector<4x128xf32> -> vector<4x128xf32>
    %7 = arith.subf %0, %6 : vector<4x128xf32>
    %8 = arith.mulf %7, %7 : vector<4x128xf32>
    %cst_7 = arith.constant dense<0.000000e+00> : vector<4x128xf32>
    %9 = tpu.matmul %8, %1, %cst_7 {dimension_numbers = #tpu.dot_dimension_numbers<[1], [0], [0], [1], [0, 0, 1, 1], [], []>} : vector<4x128xf32>, vector<128x128xf32>, vector<4x128xf32> -> vector<4x128xf32>
    %cst_8 = arith.constant 3.100000e+01 : f32
    %10 = vector.broadcast %cst_8 : f32 to vector<4x128xf32>
    %11 = arith.divf %9, %10 : vector<4x128xf32>
    %12 = math.sqrt %11 : vector<4x128xf32>
    %cst_9 = arith.constant 9.99999997E-7 : f32
    %13 = vector.broadcast %cst_9 : f32 to vector<4x128xf32>
    %14 = arith.addf %12, %13 : vector<4x128xf32>
    %cst_10 = arith.constant 0.000000e+00 : f32
    %15 = vector.broadcast %cst_10 : f32 to vector<4x128xf32>
    %16 = arith.cmpf one, %14, %15 : vector<4x128xf32>
    %cst_11 = arith.constant 1.000000e+00 : f32
    %17 = vector.broadcast %cst_11 : f32 to vector<4x128xf32>
    %18 = arith.divf %17, %14 : vector<4x128xf32>
    %cst_12 = arith.constant 0.000000e+00 : f32
    %19 = vector.broadcast %cst_12 : f32 to vector<4x128xf32>
    %20 = arith.select %16, %18, %19 : vector<4x128xi1>, vector<4x128xf32>
    %cst_13 = arith.constant dense<0.000000e+00> : vector<4x128xf32>
    %21 = tpu.matmul %20, %2, %cst_13 {dimension_numbers = #tpu.dot_dimension_numbers<[1], [0], [0], [1], [0, 0, 1, 1], [], []>} : vector<4x128xf32>, vector<128x128xf32>, vector<4x128xf32> -> vector<4x128xf32>
    %c0_14 = arith.constant 0 : index
    %c0_15 = arith.constant 0 : index
    %22 = vector.load %arg2[%c0_14, %c0_15] : memref<1x128xf32, #tpu.memory_space<vmem>>, vector<1x128xf32>
    %23 = arith.mulf %7, %21 : vector<4x128xf32>
    %24 = vector.broadcast %22 : vector<1x128xf32> to vector<4x128xf32>
    %25 = arith.mulf %24, %23 : vector<4x128xf32>
    %c0_16 = arith.constant 0 : index
    %c0_17 = arith.constant 0 : index
    %26 = vector.load %arg3[%c0_16, %c0_17] : memref<1x128xf32, #tpu.memory_space<vmem>>, vector<1x128xf32>
    %27 = vector.broadcast %26 : vector<1x128xf32> to vector<4x128xf32>
    %28 = arith.addf %25, %27 : vector<4x128xf32>
    %c0_18 = arith.constant 0 : index
    %c0_19 = arith.constant 0 : index
    %29 = vector.load %arg6[%c0_18, %c0_19] : memref<4x128xf32, #tpu.memory_space<vmem>>, vector<4x128xf32>
    tpu.vector_store %arg6[%c0_18, %c0_19], %28 {strides = array<i32>} : memref<4x128xf32, #tpu.memory_space<vmem>>, vector<4x128xf32>,
    return
  }
  func.func @transform_0(%arg0: i32) -> (i32, i32) {
    %c0_i32 = arith.constant 0 : i32
    %c0_i32_0 = arith.constant 0 : i32
    return %arg0, %c0_i32 : i32, i32
  }
  func.func @transform_1(%arg0: i32) -> (i32, i32) {
    %c0_i32 = arith.constant 0 : i32
    %c0_i32_0 = arith.constant 0 : i32
    %c0_i32_1 = arith.constant 0 : i32
    return %c0_i32, %c0_i32_0 : i32, i32
  }
  func.func @transform_2(%arg0: i32) -> (i32, i32) {
    %c0_i32 = arith.constant 0 : i32
    %c0_i32_0 = arith.constant 0 : i32
    %c0_i32_1 = arith.constant 0 : i32
    return %c0_i32, %c0_i32_0 : i32, i32
  }
  func.func @transform_3(%arg0: i32) -> (i32, i32) {
    %c0_i32 = arith.constant 0 : i32
    %c0_i32_0 = arith.constant 0 : i32
    %c0_i32_1 = arith.constant 0 : i32
    return %c0_i32, %c0_i32_0 : i32, i32
  }
  func.func @transform_4(%arg0: i32) -> (i32, i32) {
    %c0_i32 = arith.constant 0 : i32
    %c0_i32_0 = arith.constant 0 : i32
    %c0_i32_1 = arith.constant 0 : i32
    return %c0_i32, %c0_i32_0 : i32, i32
  }
  func.func @transform_5(%arg0: i32) -> (i32, i32) {
    %c0_i32 = arith.constant 0 : i32
    %c0_i32_0 = arith.constant 0 : i32
    return %arg0, %c0_i32 : i32, i32
  }
}

</mosaic_0001>

<llo_original>
// kernel: tpu_custom_call.1
$region0: #{tpu_custom_call.1}
  #allocation0 [shape = 'u32[]', space=smem, size = 0x4, offset = 0x4, fixed_abs, tag = 'smem constant byte address 0x4 - core index']
  #allocation1 [shape = 'u32[144,128]{1,0:T(1,128)}', space=vmem, size = 0x12000, scoped, tag = 'internal scratch']
  %s0 = inlined_call_operand.hbm [shape: f32[4,128], index: 0, kind: input, shape index: {}]
  %s1 = inlined_call_operand.vmem [shape: f32[1,128], index: 1, kind: input, shape index: {}]
  %s2 = inlined_call_operand.vmem [shape: f32[1,128], index: 2, kind: input, shape index: {}]
  %s3 = inlined_call_operand.hbm [shape: f32[128,128], index: 3, kind: input, shape index: {}]
  %s4 = inlined_call_operand.hbm [shape: f32[128,128], index: 4, kind: input, shape index: {}]
  %s5 = inlined_call_operand.hbm [shape: f32[4,128], index: 5, kind: output, shape index: {}]
  %s6 = sld [smem:[#allocation0]]
  $region42: #{tpu_custom_call.1} parent=0
    _
  %s8 = ssub.s32 1, %s6
  %s9 = scalar_select 0, %s8, %s6
  $region1: #{tpu_custom_call.1} parent=0
    #allocation2 [shape = 'u8[2048]{0}', space=vmem, size = 0x800, scoped, tag = 'input window, operand 0, single buffered']
    #allocation3 [shape = 's32[1]{0}', space=sflag, size = 0x4, scoped, tag = 'scoped memory for tpu_custom_call.1']
    #allocation4 [shape = 's32[1]{0}', space=sflag, size = 0x4, scoped, tag = 'scoped memory for tpu_custom_call.1']
    #allocation5 [shape = 'u8[65536]{0}', space=vmem, size = 0x10000, scoped, tag = 'input window, operand 3, single buffered']
    #allocation6 [shape = 's32[1]{0}', space=sflag, size = 0x4, scoped, tag = 'scoped memory for tpu_custom_call.1']
    #allocation7 [shape = 'u8[65536]{0}', space=vmem, size = 0x10000, scoped, tag = 'input window, operand 4, single buffered']
    #allocation8 [shape = 'u8[2048]{0}', space=vmem, size = 0x800, scoped, tag = 'output window, operand 0, single buffered']
    %10 = vsyncpa [#allocation3], 0
    %11 = vsyncpa [#allocation6], 0
    %12 = vsyncpa [#allocation4], 0
    // Predicated region
    $region2: #{tpu_custom_call.1} parent=1 // pred_check
      _
    $region3: #{tpu_custom_call.1} parent=1 // pred_check_branch
      %14 = sbr.rel (0) target = $region5
    $region4: #{tpu_custom_call.1} parent=1 // pred_region
      %s16 = ssub.s32 64, 64
      %17 = vsyncadd [#allocation3], %s16
      %s19 = sshll.u32 [#allocation2], 4
      %s20 = int_to_ptr.vmem [resolvable:$true] %s19
      %22 = dma.hbm_to_vmem [thread:$0]  %s0, 64, %s20, [#allocation3]
    $region5: #{tpu_custom_call.1} parent=1 // pred_fallthru
      _
    // Predicated region
    $region6: #{tpu_custom_call.1} parent=1 // pred_check
      _
    $region7: #{tpu_custom_call.1} parent=1 // pred_check_branch
      %24 = sbr.rel (0) target = $region9
    $region8: #{tpu_custom_call.1} parent=1 // pred_region
      _
    $region9: #{tpu_custom_call.1} parent=1 // pred_fallthru
      _
    // Predicated region
    $region10: #{tpu_custom_call.1} parent=1 // pred_check
      _
    $region11: #{tpu_custom_call.1} parent=1 // pred_check_branch
      %26 = sbr.rel (0) target = $region13
    $region12: #{tpu_custom_call.1} parent=1 // pred_region
      _
    $region13: #{tpu_custom_call.1} parent=1 // pred_fallthru
      _
    // Predicated region
    $region14: #{tpu_custom_call.1} parent=1 // pred_check
      _
    $region15: #{tpu_custom_call.1} parent=1 // pred_check_branch
      %28 = sbr.rel (0) target = $region17
    $region16: #{tpu_custom_call.1} parent=1 // pred_region
      %s30 = ssub.s32 2048, 2048
      %31 = vsyncadd [#allocation6], %s30
      %s32 = sshll.u32 [#allocation5], 4
      %s33 = int_to_ptr.vmem [resolvable:$true] %s32
      %38 = dma.hbm_to_vmem [thread:$0]  %s3, 2048, %s33, [#allocation6], 128, 128, 8
    $region17: #{tpu_custom_call.1} parent=1 // pred_fallthru
      _
    // Predicated region
    $region18: #{tpu_custom_call.1} parent=1 // pred_check
      _
    $region19: #{tpu_custom_call.1} parent=1 // pred_check_branch
      %40 = sbr.rel (0) target = $region21
    $region20: #{tpu_custom_call.1} parent=1 // pred_region
      %s42 = ssub.s32 2048, 2048
      %43 = vsyncadd [#allocation6], %s42
      %s44 = sshll.u32 [#allocation7], 4
      %s45 = int_to_ptr.vmem [resolvable:$true] %s44
      %50 = dma.hbm_to_vmem [thread:$0]  %s4, 2048, %s45, [#allocation6], 128, 128, 8
    $region21: #{tpu_custom_call.1} parent=1 // pred_fallthru
      _
    // Predicated region
    $region22: #{tpu_custom_call.1} parent=1 // pred_check
      _
    $region23: #{tpu_custom_call.1} parent=1 // pred_check_branch
      %52 = sbr.rel (0) target = $region25
    $region24: #{tpu_custom_call.1} parent=1 // pred_region
      %53 = dma.done [#allocation3], 64
    $region25: #{tpu_custom_call.1} parent=1 // pred_fallthru
      _
    // Predicated region
    $region26: #{tpu_custom_call.1} parent=1 // pred_check
      _
    $region27: #{tpu_custom_call.1} parent=1 // pred_check_branch
      %55 = sbr.rel (0) target = $region29
    $region28: #{tpu_custom_call.1} parent=1 // pred_region
      %56 = dma.done [#allocation6], 2048
    $region29: #{tpu_custom_call.1} parent=1 // pred_fallthru
      _
    // Predicated region
    $region30: #{tpu_custom_call.1} parent=1 // pred_check
      _
    $region31: #{tpu_custom_call.1} parent=1 // pred_check_branch
      %58 = sbr.rel (0) target = $region33
    $region32: #{tpu_custom_call.1} parent=1 // pred_region
      %59 = dma.done [#allocation6], 2048
    $region33: #{tpu_custom_call.1} parent=1 // pred_fallthru
      _
    %v60 = vld [vmem:[#allocation2] sm:$0xf]
    %v61 = vld [vmem:[#allocation5] sm:$0xff]
    %v62 = vld [vmem:[#allocation5 + $0x8] sm:$0xff]
    %v63 = vld [vmem:[#allocation5 + $0x10] sm:$0xff]
    %v64 = vld [vmem:[#allocation5 + $0x18] sm:$0xff]
    %v65 = vld [vmem:[#allocation5 + $0x20] sm:$0xff]
    %v66 = vld [vmem:[#allocation5 + $0x28] sm:$0xff]
    %v67 = vld [vmem:[#allocation5 + $0x30] sm:$0xff]
    %v68 = vld [vmem:[#allocation5 + $0x38] sm:$0xff]
    %v69 = vld [vmem:[#allocation5 + $0x40] sm:$0xff]
    %v70 = vld [vmem:[#allocation5 + $0x48] sm:$0xff]
    %v71 = vld [vmem:[#allocation5 + $0x50] sm:$0xff]
    %v72 = vld [vmem:[#allocation5 + $0x58] sm:$0xff]
    %v73 = vld [vmem:[#allocation5 + $0x60] sm:$0xff]
    %v74 = vld [vmem:[#allocation5 + $0x68] sm:$0xff]
    %v75 = vld [vmem:[#allocation5 + $0x70] sm:$0xff]
    %v76 = vld [vmem:[#allocation5 + $0x78] sm:$0xff]
    %v77 = vld [vmem:[#allocation7] sm:$0xff]
    %v78 = vld [vmem:[#allocation7 + $0x8] sm:$0xff]
    %v79 = vld [vmem:[#allocation7 + $0x10] sm:$0xff]
    %v80 = vld [vmem:[#allocation7 + $0x18] sm:$0xff]
    %v81 = vld [vmem:[#allocation7 + $0x20] sm:$0xff]
    %v82 = vld [vmem:[#allocation7 + $0x28] sm:$0xff]
    %v83 = vld [vmem:[#allocation7 + $0x30] sm:$0xff]
    %v84 = vld [vmem:[#allocation7 + $0x38] sm:$0xff]
    %v85 = vld [vmem:[#allocation7 + $0x40] sm:$0xff]
    %v86 = vld [vmem:[#allocation7 + $0x48] sm:$0xff]
    %v87 = vld [vmem:[#allocation7 + $0x50] sm:$0xff]
    %v88 = vld [vmem:[#allocation7 + $0x58] sm:$0xff]
    %v89 = vld [vmem:[#allocation7 + $0x60] sm:$0xff]
    %v90 = vld [vmem:[#allocation7 + $0x68] sm:$0xff]
    %v91 = vld [vmem:[#allocation7 + $0x70] sm:$0xff]
    %v92 = vld [vmem:[#allocation7 + $0x78] sm:$0xff]
    %93 = vmatprep.subr.mxu0 0.0
    %94 = vmatpush1.msra.mxu0 %v61
    %95 = vmatprep.subr.mxu0 0.0
    %96 = vmatpush1.msra.mxu0 %v62
    %97 = vmatprep.subr.mxu0 0.0
    %98 = vmatpush1.msra.mxu0 %v63
    %99 = vmatprep.subr.mxu0 0.0
    %100 = vmatpush1.msra.mxu0 %v64
    %101 = vmatprep.subr.mxu0 0.0
    %102 = vmatpush1.msra.mxu0 %v65
    %103 = vmatprep.subr.mxu0 0.0
    %104 = vmatpush1.msra.mxu0 %v66
    %105 = vmatprep.subr.mxu0 0.0
    %106 = vmatpush1.msra.mxu0 %v67
    %107 = vmatprep.subr.mxu0 0.0
    %108 = vmatpush1.msra.mxu0 %v68
    %109 = vmatprep.subr.mxu0 0.0
    %110 = vmatpush1.msra.mxu0 %v69
    %111 = vmatprep.subr.mxu0 0.0
    %112 = vmatpush1.msra.mxu0 %v70
    %113 = vmatprep.subr.mxu0 0.0
    %114 = vmatpush1.msra.mxu0 %v71
    %115 = vmatprep.subr.mxu0 0.0
    %116 = vmatpush1.msra.mxu0 %v72
    %117 = vmatprep.subr.mxu0 0.0
    %118 = vmatpush1.msra.mxu0 %v73
    %119 = vmatprep.subr.mxu0 0.0
    %120 = vmatpush1.msra.mxu0 %v74
    %121 = vmatprep.subr.mxu0 0.0
    %122 = vmatpush1.msra.mxu0 %v75
    %123 = vmatprep.subr.mxu0 0.0
    %124 = vmatpush1.msra.mxu0 %v76
    %125 = vmatprep.subr.mxu0 0.0
    %126 = vmatpush1.msra.mxu0 0.0
    %127 = vmatprep.subr.mxu0 0.0
    %128 = vmatpush1.msra.mxu0 0.0
    %129 = vmatprep.subr.mxu0 0.0
    %130 = vmatpush1.msra.mxu0 0.0
    %131 = vmatprep.subr.mxu0 0.0
    %132 = vmatpush1.msra.mxu0 0.0
    %133 = vmatprep.subr.mxu0 0.0
    %134 = vmatpush1.msra.mxu0 0.0
    %135 = vmatprep.subr.mxu0 0.0
    %136 = vmatpush1.msra.mxu0 0.0
    %137 = vmatprep.subr.mxu0 0.0
    %138 = vmatpush1.msra.mxu0 0.0
    %139 = vmatprep.subr.mxu0 0.0
    %140 = vmatpush1.msra.mxu0 0.0
    %141 = vmatprep.subr.mxu0 0.0
    %142 = vmatpush1.msra.mxu0 0.0
    %143 = vmatprep.subr.mxu0 0.0
    %144 = vmatpush1.msra.mxu0 0.0
    %145 = vmatprep.subr.mxu0 0.0
    %146 = vmatpush1.msra.mxu0 0.0
    %147 = vmatprep.subr.mxu0 0.0
    %148 = vmatpush1.msra.mxu0 0.0
    %149 = vmatprep.subr.mxu0 0.0
    %150 = vmatpush1.msra.mxu0 0.0
    %151 = vmatprep.subr.mxu0 0.0
    %152 = vmatpush1.msra.mxu0 0.0
    %153 = vmatprep.subr.mxu0 0.0
    %154 = vmatpush1.msra.mxu0 0.0
    %155 = vmatprep.subr.mxu0 0.0
    %156 = vmatpush1.msra.mxu0 0.0
    %157 = vmatprep.mubr.f32.mxu0 0.0
    %158 = vmatmul.mubr.f32.gmra.mrb[0].mxu0 %v60
    %v159 = vpop.f32.mrb[0].mxu0
    %v160 = vadd.f32 0.0, %v159
    %v161 = vpop.f32.mrb[0].mxu0
    %162 = vdwg.mxu0
    %v163 = vrcp.pop 32.0
    %v164 = vmul.f32 %v160, %v163
    %165 = vmatprep.subr.mxu0 0.0
    %166 = vmatpush1.msra.mxu0 %v77
    %167 = vmatprep.subr.mxu0 0.0
    %168 = vmatpush1.msra.mxu0 %v78
    %169 = vmatprep.subr.mxu0 0.0
    %170 = vmatpush1.msra.mxu0 %v79
    %171 = vmatprep.subr.mxu0 0.0
    %172 = vmatpush1.msra.mxu0 %v80
    %173 = vmatprep.subr.mxu0 0.0
    %174 = vmatpush1.msra.mxu0 %v81
    %175 = vmatprep.subr.mxu0 0.0
    %176 = vmatpush1.msra.mxu0 %v82
    %177 = vmatprep.subr.mxu0 0.0
    %178 = vmatpush1.msra.mxu0 %v83
    %179 = vmatprep.subr.mxu0 0.0
    %180 = vmatpush1.msra.mxu0 %v84
    %181 = vmatprep.subr.mxu0 0.0
    %182 = vmatpush1.msra.mxu0 %v85
    %183 = vmatprep.subr.mxu0 0.0
    %184 = vmatpush1.msra.mxu0 %v86
    %185 = vmatprep.subr.mxu0 0.0
    %186 = vmatpush1.msra.mxu0 %v87
    %187 = vmatprep.subr.mxu0 0.0
    %188 = vmatpush1.msra.mxu0 %v88
    %189 = vmatprep.subr.mxu0 0.0
    %190 = vmatpush1.msra.mxu0 %v89
    %191 = vmatprep.subr.mxu0 0.0
    %192 = vmatpush1.msra.mxu0 %v90
    %193 = vmatprep.subr.mxu0 0.0
    %194 = vmatpush1.msra.mxu0 %v91
    %195 = vmatprep.subr.mxu0 0.0
    %196 = vmatpush1.msra.mxu0 %v92
    %197 = vmatprep.subr.mxu0 0.0
    %198 = vmatpush1.msra.mxu0 0.0
    %199 = vmatprep.subr.mxu0 0.0
    %200 = vmatpush1.msra.mxu0 0.0
    %201 = vmatprep.subr.mxu0 0.0
    %202 = vmatpush1.msra.mxu0 0.0
    %203 = vmatprep.subr.mxu0 0.0
    %204 = vmatpush1.msra.mxu0 0.0
    %205 = vmatprep.subr.mxu0 0.0
    %206 = vmatpush1.msra.mxu0 0.0
    %207 = vmatprep.subr.mxu0 0.0
    %208 = vmatpush1.msra.mxu0 0.0
    %209 = vmatprep.subr.mxu0 0.0
    %210 = vmatpush1.msra.mxu0 0.0
    %211 = vmatprep.subr.mxu0 0.0
    %212 = vmatpush1.msra.mxu0 0.0
    %213 = vmatprep.subr.mxu0 0.0
    %214 = vmatpush1.msra.mxu0 0.0
    %215 = vmatprep.subr.mxu0 0.0
    %216 = vmatpush1.msra.mxu0 0.0
    %217 = vmatprep.subr.mxu0 0.0
    %218 = vmatpush1.msra.mxu0 0.0
    %219 = vmatprep.subr.mxu0 0.0
    %220 = vmatpush1.msra.mxu0 0.0
    %221 = vmatprep.subr.mxu0 0.0
    %222 = vmatpush1.msra.mxu0 0.0
    %223 = vmatprep.subr.mxu0 0.0
    %224 = vmatpush1.msra.mxu0 0.0
    %225 = vmatprep.subr.mxu0 0.0
    %226 = vmatpush1.msra.mxu0 0.0
    %227 = vmatprep.subr.mxu0 0.0
    %228 = vmatpush1.msra.mxu0 0.0
    %229 = vmatprep.mubr.f32.mxu0 0.0
    %230 = vmatmul.mubr.f32.gmra.mrb[0].mxu0 %v164
    %v231 = vpop.f32.mrb[0].mxu0
    %v232 = vadd.f32 0.0, %v231
    %v233 = vpop.f32.mrb[0].mxu0
    %234 = vdwg.mxu0
    %v235 = vsub.f32 %v60, %v232
    %v236 = vmul.f32 %v235, %v235
    %237 = vmatprep.subr.mxu0 0.0
    %238 = vmatpush1.msra.mxu0 %v61
    %239 = vmatprep.subr.mxu0 0.0
    %240 = vmatpush1.msra.mxu0 %v62
    %241 = vmatprep.subr.mxu0 0.0
    %242 = vmatpush1.msra.mxu0 %v63
    %243 = vmatprep.subr.mxu0 0.0
    %244 = vmatpush1.msra.mxu0 %v64
    %245 = vmatprep.subr.mxu0 0.0
    %246 = vmatpush1.msra.mxu0 %v65
    %247 = vmatprep.subr.mxu0 0.0
    %248 = vmatpush1.msra.mxu0 %v66
    %249 = vmatprep.subr.mxu0 0.0
    %250 = vmatpush1.msra.mxu0 %v67
    %251 = vmatprep.subr.mxu0 0.0
    %252 = vmatpush1.msra.mxu0 %v68
    %253 = vmatprep.subr.mxu0 0.0
    %254 = vmatpush1.msra.mxu0 %v69
    %255 = vmatprep.subr.mxu0 0.0
    %256 = vmatpush1.msra.mxu0 %v70
    %257 = vmatprep.subr.mxu0 0.0
    %258 = vmatpush1.msra.mxu0 %v71
    %259 = vmatprep.subr.mxu0 0.0
    %260 = vmatpush1.msra.mxu0 %v72
    %261 = vmatprep.subr.mxu0 0.0
    %262 = vmatpush1.msra.mxu0 %v73
    %263 = vmatprep.subr.mxu0 0.0
    %264 = vmatpush1.msra.mxu0 %v74
    %265 = vmatprep.subr.mxu0 0.0
    %266 = vmatpush1.msra.mxu0 %v75
    %267 = vmatprep.subr.mxu0 0.0
    %268 = vmatpush1.msra.mxu0 %v76
    %269 = vmatprep.subr.mxu0 0.0
    %270 = vmatpush1.msra.mxu0 0.0
    %271 = vmatprep.subr.mxu0 0.0
    %272 = vmatpush1.msra.mxu0 0.0
    %273 = vmatprep.subr.mxu0 0.0
    %274 = vmatpush1.msra.mxu0 0.0
    %275 = vmatprep.subr.mxu0 0.0
    %276 = vmatpush1.msra.mxu0 0.0
    %277 = vmatprep.subr.mxu0 0.0
    %278 = vmatpush1.msra.mxu0 0.0
    %279 = vmatprep.subr.mxu0 0.0
    %280 = vmatpush1.msra.mxu0 0.0
    %281 = vmatprep.subr.mxu0 0.0
    %282 = vmatpush1.msra.mxu0 0.0
    %283 = vmatprep.subr.mxu0 0.0
    %284 = vmatpush1.msra.mxu0 0.0
    %285 = vmatprep.subr.mxu0 0.0
    %286 = vmatpush1.msra.mxu0 0.0
    %287 = vmatprep.subr.mxu0 0.0
    %288 = vmatpush1.msra.mxu0 0.0
    %289 = vmatprep.subr.mxu0 0.0
    %290 = vmatpush1.msra.mxu0 0.0
    %291 = vmatprep.subr.mxu0 0.0
    %292 = vmatpush1.msra.mxu0 0.0
    %293 = vmatprep.subr.mxu0 0.0
    %294 = vmatpush1.msra.mxu0 0.0
    %295 = vmatprep.subr.mxu0 0.0
    %296 = vmatpush1.msra.mxu0 0.0
    %297 = vmatprep.subr.mxu0 0.0
    %298 = vmatpush1.msra.mxu0 0.0
    %299 = vmatprep.subr.mxu0 0.0
    %300 = vmatpush1.msra.mxu0 0.0
    %301 = vmatprep.mubr.f32.mxu0 0.0
    %302 = vmatmul.mubr.f32.gmra.mrb[0].mxu0 %v236
    %v303 = vpop.f32.mrb[0].mxu0
    %v304 = vadd.f32 0.0, %v303
    %v305 = vpop.f32.mrb[0].mxu0
    %306 = vdwg.mxu0
    %v307 = vrcp.pop 31.0
    %v308 = vmul.f32 %v304, %v307
    %v309 = vrsqrt.pop %v308
    %v310 = vmul.f32 %v308, %v309
    %vm311 = vcmp.eq.f32.partialorder %v308, inf
    %v312 = vsel %vm311, %v308, %v310
    %vm313 = vcmp.eq.f32.partialorder %v308, 0.0
    %v314 = vand.u32 %v308, 2147483648
    %v315 = vsel %vm313, %v314, %v312
    %v316 = vadd.f32 %v315, 1e-06
    %vm317 = vcmp.ne.f32.partialorder %v316, 0.0
    %v318 = vrcp.pop %v316
    %v319 = vmul.f32 1.0, %v318
    %v320 = vsel %vm317, %v319, 0.0
    %321 = vmatprep.subr.mxu0 0.0
    %322 = vmatpush1.msra.mxu0 %v77
    %323 = vmatprep.subr.mxu0 0.0
    %324 = vmatpush1.msra.mxu0 %v78
    %325 = vmatprep.subr.mxu0 0.0
    %326 = vmatpush1.msra.mxu0 %v79
    %327 = vmatprep.subr.mxu0 0.0
    %328 = vmatpush1.msra.mxu0 %v80
    %329 = vmatprep.subr.mxu0 0.0
    %330 = vmatpush1.msra.mxu0 %v81
    %331 = vmatprep.subr.mxu0 0.0
    %332 = vmatpush1.msra.mxu0 %v82
    %333 = vmatprep.subr.mxu0 0.0
    %334 = vmatpush1.msra.mxu0 %v83
    %335 = vmatprep.subr.mxu0 0.0
    %336 = vmatpush1.msra.mxu0 %v84
    %337 = vmatprep.subr.mxu0 0.0
    %338 = vmatpush1.msra.mxu0 %v85
    %339 = vmatprep.subr.mxu0 0.0
    %340 = vmatpush1.msra.mxu0 %v86
    %341 = vmatprep.subr.mxu0 0.0
    %342 = vmatpush1.msra.mxu0 %v87
    %343 = vmatprep.subr.mxu0 0.0
    %344 = vmatpush1.msra.mxu0 %v88
    %345 = vmatprep.subr.mxu0 0.0
    %346 = vmatpush1.msra.mxu0 %v89
    %347 = vmatprep.subr.mxu0 0.0
    %348 = vmatpush1.msra.mxu0 %v90
    %349 = vmatprep.subr.mxu0 0.0
    %350 = vmatpush1.msra.mxu0 %v91
    %351 = vmatprep.subr.mxu0 0.0
    %352 = vmatpush1.msra.mxu0 %v92
    %353 = vmatprep.subr.mxu0 0.0
    %354 = vmatpush1.msra.mxu0 0.0
    %355 = vmatprep.subr.mxu0 0.0
    %356 = vmatpush1.msra.mxu0 0.0
    %357 = vmatprep.subr.mxu0 0.0
    %358 = vmatpush1.msra.mxu0 0.0
    %359 = vmatprep.subr.mxu0 0.0
    %360 = vmatpush1.msra.mxu0 0.0
    %361 = vmatprep.subr.mxu0 0.0
    %362 = vmatpush1.msra.mxu0 0.0
    %363 = vmatprep.subr.mxu0 0.0
    %364 = vmatpush1.msra.mxu0 0.0
    %365 = vmatprep.subr.mxu0 0.0
    %366 = vmatpush1.msra.mxu0 0.0
    %367 = vmatprep.subr.mxu0 0.0
    %368 = vmatpush1.msra.mxu0 0.0
    %369 = vmatprep.subr.mxu0 0.0
    %370 = vmatpush1.msra.mxu0 0.0
    %371 = vmatprep.subr.mxu0 0.0
    %372 = vmatpush1.msra.mxu0 0.0
    %373 = vmatprep.subr.mxu0 0.0
    %374 = vmatpush1.msra.mxu0 0.0
    %375 = vmatprep.subr.mxu0 0.0
    %376 = vmatpush1.msra.mxu0 0.0
    %377 = vmatprep.subr.mxu0 0.0
    %378 = vmatpush1.msra.mxu0 0.0
    %379 = vmatprep.subr.mxu0 0.0
    %380 = vmatpush1.msra.mxu0 0.0
    %381 = vmatprep.subr.mxu0 0.0
    %382 = vmatpush1.msra.mxu0 0.0
    %383 = vmatprep.subr.mxu0 0.0
    %384 = vmatpush1.msra.mxu0 0.0
    %385 = vmatprep.mubr.f32.mxu0 0.0
    %386 = vmatmul.mubr.f32.gmra.mrb[0].mxu0 %v320
    %v387 = vpop.f32.mrb[0].mxu0
    %v388 = vadd.f32 0.0, %v387
    %v389 = vpop.f32.mrb[0].mxu0
    %390 = vdwg.mxu0
    %v391 = vld [vmem:[%s1] sm:$0x1]
    %v392 = vmul.f32 %v235, %v388
    %v394 = vlaneseq
    %v395 = vshrl.u32 %v394, 7
    %v396 = vsub.s32 0, %v395
    %v397 = vrot.slane %v391, %v396
    %v399 = vmul.f32 %v397, %v392
    %v400 = vld [vmem:[%s2] sm:$0x1]
    %v402 = vlaneseq
    %v403 = vshrl.u32 %v402, 7
    %v404 = vsub.s32 0, %v403
    %v405 = vrot.slane %v400, %v404
    %v407 = vadd.f32 %v399, %v405
    %408 = vst [vmem:[#allocation8] sm:$0xf] %v407
    // Predicated region
    $region34: #{tpu_custom_call.1} parent=1 // pred_check
      _
    $region35: #{tpu_custom_call.1} parent=1 // pred_check_branch
      %410 = sbr.rel (0) target = $region37
    $region36: #{tpu_custom_call.1} parent=1 // pred_region
      %s412 = ssub.s32 64, 64
      %413 = vsyncadd [#allocation4], %s412
      %s415 = sshll.u32 [#allocation8], 4
      %s416 = int_to_ptr.vmem [resolvable:$true] %s415
      %418 = dma.vmem_to_hbm [thread:$0]  %s416, 64, %s5, [#allocation4]
    $region37: #{tpu_custom_call.1} parent=1 // pred_fallthru
      _
    // Predicated region
    $region38: #{tpu_custom_call.1} parent=1 // pred_check
      _
    $region39: #{tpu_custom_call.1} parent=1 // pred_check_branch
      %420 = sbr.rel (0) target = $region41
    $region40: #{tpu_custom_call.1} parent=1 // pred_region
      %421 = dma.done [#allocation4], 64
    $region41: #{tpu_custom_call.1} parent=1 // pred_fallthru
      _
    %422 = vsyncpa [#allocation3], 1
    %423 = vsyncpa [#allocation6], 1
    %424 = vsyncpa [#allocation4], 1

</llo_original>
